<compile_context>
chip_gen: v7x
topology: tpu7x:2x2x1
jax: 0.10.0
libtpu: 0.0.40
codegen_flags: <defaults>
</compile_context>

<pallas_src>
import math

import numpy as np
import jax
import jax.numpy as jnp
from jax.experimental import pallas as pl
from jax.experimental.pallas import tpu as pltpu


# ----------------------------- Pallas kernel ------------------------------ #
def _input_layer_kernel(x_ref, w_ref, b_ref, pe_ref, o_ref):
    # x_ref : (M_tile, E)      flattened (batch, time) rows, input dtype
    # w_ref : (E, D_pad)       bf16 weight in (in, out) layout
    # b_ref : (1, D_pad)       f32 bias (zero in the padded columns)
    # pe_ref: (M_tile, D_pad)  f32 PE rows for one block (blocks start at batch boundaries)
    # o_ref : (M_tile, D_pad)
    x = x_ref[...].astype(jnp.bfloat16)                                   # bf16 feeds the MXU
    y = jnp.dot(x, w_ref[...], preferred_element_type=jnp.float32)        # f32 accumulation
    y = jnp.maximum(y + b_ref[...], 0.0) + pe_ref[...]                    # bias + ReLU + PE in f32
    o_ref[...] = y.astype(o_ref.dtype)


# ------------------------------- wrapper ----------------------------------- #
def _pick_batch_block(B, T, target_rows):
    """Largest divisor b of B with b*T a sublane multiple (8) and b*T <= target_rows."""
    divisors = [d for d in range(1, B + 1) if B % d == 0]
    ok = [d for d in divisors if (d * T) % 8 == 0]
    if not ok:
        return B                      # single full-array block (always layout-legal)
    small = [d for d in ok if d * T <= target_rows]
    return max(small) if small else min(ok)


def input_layer_forward(src, weight_t_bf16, bias, pe, *, target_rows=256):
    """src: (B, T, E); weight_t_bf16: (E, D) bf16; bias: (D,) f32; pe: (>=T, D) f32."""
    B, T, E = src.shape
    D = weight_t_bf16.shape[1]
    D_pad = -(-D // 128) * 128                    # lane-dense output stores
    B_blk = _pick_batch_block(B, T, target_rows)  # rows per step ~ target_rows
    M_tile = B_blk * T
    n_rows = B * T
    n_blocks = B // B_blk                         # exact: B_blk divides B

    x2d = src.reshape(n_rows, E)
    w_p = jnp.pad(weight_t_bf16, ((0, 0), (0, D_pad - D)))
    b_p = jnp.pad(bias.astype(jnp.float32), (0, D_pad - D)).reshape(1, D_pad)
    pe_p = jnp.pad(pe[:T].astype(jnp.float32), ((0, 0), (0, D_pad - D)))
    pe_blk = jnp.tile(pe_p, (B_blk, 1))           # (M_tile, D_pad), shared by every block

    # Rough VMEM budget: double-buffered x/out tiles + resident constants.
    # Only raise the scoped VMEM limit if the tiles actually need it (v6e default 32 MiB).
    itm = src.dtype.itemsize
    vmem_need = (2 * M_tile * E * itm + 2 * M_tile * D_pad * itm
                 + E * D_pad * 2 + M_tile * D_pad * 4 + D_pad * 4)
    cp_kwargs = {"dimension_semantics": ("parallel",)}   # grid > 1 shards across TCs on v7x
    if vmem_need > 30 * 1024 * 1024:
        cp_kwargs["vmem_limit_bytes"] = min(int(vmem_need * 2), 100 * 1024 * 1024)
    compiler_params = pltpu.CompilerParams(**cp_kwargs)

    def _call(single_buffer_consts):
        const_kw = {"pipeline_mode": pl.Buffered(1)} if single_buffer_consts else {}
        grid_spec = pltpu.PrefetchScalarGridSpec(
            num_scalar_prefetch=0,
            grid=(n_blocks,),
            in_specs=[
                pl.BlockSpec((M_tile, E), lambda i: (i, 0)),               # activations
                pl.BlockSpec((E, D_pad), lambda i: (0, 0), **const_kw),    # weight (resident)
                pl.BlockSpec((1, D_pad), lambda i: (0, 0), **const_kw),    # bias (resident)
                pl.BlockSpec((M_tile, D_pad), lambda i: (0, 0), **const_kw),  # PE (resident)
            ],
            out_specs=pl.BlockSpec((M_tile, D_pad), lambda i: (i, 0)),
        )
        return pl.pallas_call(
            _input_layer_kernel,
            out_shape=jax.ShapeDtypeStruct((n_rows, D_pad), src.dtype),
            grid_spec=grid_spec,
            compiler_params=compiler_params,
        )(x2d, w_p, b_p, pe_blk)

    try:
        out_pad = _call(True)
    except Exception:
        # pipeline_mode / Buffered(1) unsupported on this JAX build -> default buffering.
        out_pad = _call(False)

    return out_pad[:, :D].reshape(B, T, D)


# ------------------------------ param setup ------------------------------- #
def make_positional_encoding(max_len, d_model):
    """Exactly mirrors PositionalEncoding.__init__ from the PyTorch module."""
    position = np.arange(0, max_len, dtype=np.float32)[:, None]            # (max_len, 1)
    div_term = np.exp(np.arange(0, d_model, 2, dtype=np.float32)
                      * (-math.log(10000.0) / d_model))                     # (ceil(D/2),)
    pe = np.zeros((max_len, d_model), dtype=np.float32)
    pe[:, 0::2] = np.sin(position * div_term)
    if d_model % 2 != 0:
        pe[:, 1::2] = np.cos(position * div_term)[:, :-1]
    else:
        pe[:, 1::2] = np.cos(position * div_term)
    return jnp.asarray(pe)


def init_input_layer_params(key, embedding_size, d_model, initrange=0.1):
    """Deterministic init mirroring InputLayer.init_weights()."""
    weight = jax.random.uniform(key, (d_model, embedding_size),
                                minval=-initrange, maxval=initrange,
                                dtype=jnp.float32)
    bias = jnp.zeros((d_model,), dtype=jnp.float32)
    return weight, bias


def prepare_linear_params(weight, bias):
    """One-time prep: PyTorch (D, E) weight -> (E, D) bf16 for the MXU; f32 bias."""
    return jnp.asarray(weight).T.astype(jnp.bfloat16), jnp.asarray(bias).astype(jnp.float32)


# TODO(synk): dropout is constructed in PositionalEncoding.__init__ but never
# applied in its forward(), so it is intentionally omitted here.


if __name__ == "__main__":
    # Small shapes consistent with the module's forward:
    # batch=2, seq=max_len=8, embedding_size=16, d_model=32.
    B, T, E, D = 2, 8, 16, 32
    max_len = T  # PE broadcast in the reference requires dim-1 == max_len

    key = jax.random.PRNGKey(0)
    k_src, k_w = jax.random.split(key)

    src = jax.random.normal(k_src, (B, T, E), dtype=jnp.float32)
    weight, bias = init_input_layer_params(k_w, E, D)
    pe = make_positional_encoding(max_len, D)

    # One-time parameter prep (hoists the transpose + bf16 cast off the hot path).
    weight_t_bf16, bias_f32 = prepare_linear_params(weight, bias)

    out = input_layer_forward(src, weight_t_bf16, bias_f32, pe)
    out = jax.block_until_ready(out)

    # Pure-JAX f32 reference (Linear -> ReLU -> + pe[:T]).  The kernel matmul is
    # bf16 with f32 accumulation, so use a correspondingly loose tolerance.
    ref = jnp.maximum(jnp.einsum("bte,de->btd", src, weight) + bias, 0.0) + pe[:T][None]
    assert out.shape == (B, T, D)
    np.testing.assert_allclose(np.asarray(out), np.asarray(ref), rtol=2e-2, atol=2e-2)

    print("KERNEL_OK")
</pallas_src>

<mosaic_0001>
module attributes {stable_mosaic.version = 11 : i64} {
  func.func @_input_layer_kernel(%arg0: i32, %arg1: memref<16x16xf32, #tpu.memory_space<vmem>>, %arg2: memref<16x128xbf16, #tpu.memory_space<vmem>>, %arg3: memref<1x128xf32, #tpu.memory_space<vmem>>, %arg4: memref<16x128xf32, #tpu.memory_space<vmem>>, %arg5: memref<16x128xf32, #tpu.memory_space<vmem>>) attributes {dimension_semantics = [#tpu.dimension_semantics<parallel>], iteration_bounds = array<i64: 1>, scalar_prefetch = 0 : i64, scratch_operands = 0 : i64, tpu.core_type = #tpu.core_type<tc>, window_params = [{transform_indices = @transform_0, window_bounds = array<i64: 16, 16>}, {pipeline_mode = #tpu.pipeline_mode<synchronous>, transform_indices = @transform_1, window_bounds = array<i64: 16, 128>}, {pipeline_mode = #tpu.pipeline_mode<synchronous>, transform_indices = @transform_2, window_bounds = array<i64: 1, 128>}, {pipeline_mode = #tpu.pipeline_mode<synchronous>, transform_indices = @transform_3, window_bounds = array<i64: 16, 128>}, {transform_indices = @transform_4, window_bounds = array<i64: 16, 128>}]} {
    %c0 = arith.constant 0 : index
    %c0_0 = arith.constant 0 : index
    %0 = vector.load %arg1[%c0, %c0_0] : memref<16x16xf32, #tpu.memory_space<vmem>>, vector<16x16xf32>
    %1 = arith.truncf %0 : vector<16x16xf32> to vector<16x16xbf16>
    %c0_1 = arith.constant 0 : index
    %c0_2 = arith.constant 0 : index
    %2 = vector.load %arg2[%c0_1, %c0_2] : memref<16x128xbf16, #tpu.memory_space<vmem>>, vector<16x128xbf16>
    %cst = arith.constant dense<0.000000e+00> : vector<16x128xf32>
    %3 = tpu.matmul %1, %2, %cst {dimension_numbers = #tpu.dot_dimension_numbers<[1], [0], [0], [1], [0, 0, 1, 1], [], []>} : vector<16x16xbf16>, vector<16x128xbf16>, vector<16x128xf32> -> vector<16x128xf32>
    %c0_3 = arith.constant 0 : index
    %c0_4 = arith.constant 0 : index
    %4 = vector.load %arg3[%c0_3, %c0_4] : memref<1x128xf32, #tpu.memory_space<vmem>>, vector<1x128xf32>
    %5 = vector.broadcast %4 : vector<1x128xf32> to vector<16x128xf32>
    %6 = arith.addf %3, %5 : vector<16x128xf32>
    %cst_5 = arith.constant 0.000000e+00 : f32
    %7 = vector.broadcast %cst_5 : f32 to vector<16x128xf32>
    %8 = arith.maximumf %6, %7 : vector<16x128xf32>
    %c0_6 = arith.constant 0 : index
    %c0_7 = arith.constant 0 : index
    %9 = vector.load %arg4[%c0_6, %c0_7] : memref<16x128xf32, #tpu.memory_space<vmem>>, vector<16x128xf32>
    %10 = arith.addf %8, %9 : vector<16x128xf32>
    %c0_8 = arith.constant 0 : index
    %c0_9 = arith.constant 0 : index
    %11 = vector.load %arg5[%c0_8, %c0_9] : memref<16x128xf32, #tpu.memory_space<vmem>>, vector<16x128xf32>
    tpu.vector_store %arg5[%c0_8, %c0_9], %10 {strides = array<i32>} : memref<16x128xf32, #tpu.memory_space<vmem>>, vector<16x128xf32>,
    return
  }
  func.func @transform_0(%arg0: i32) -> (i32, i32) {
    %c0_i32 = arith.constant 0 : i32
    %c0_i32_0 = arith.constant 0 : i32
    return %arg0, %c0_i32 : i32, i32
  }
  func.func @transform_1(%arg0: i32) -> (i32, i32) {
    %c0_i32 = arith.constant 0 : i32
    %c0_i32_0 = arith.constant 0 : i32
    %c0_i32_1 = arith.constant 0 : i32
    return %c0_i32, %c0_i32_0 : i32, i32
  }
  func.func @transform_2(%arg0: i32) -> (i32, i32) {
    %c0_i32 = arith.constant 0 : i32
    %c0_i32_0 = arith.constant 0 : i32
    %c0_i32_1 = arith.constant 0 : i32
    return %c0_i32, %c0_i32_0 : i32, i32
  }
  func.func @transform_3(%arg0: i32) -> (i32, i32) {
    %c0_i32 = arith.constant 0 : i32
    %c0_i32_0 = arith.constant 0 : i32
    %c0_i32_1 = arith.constant 0 : i32
    return %c0_i32, %c0_i32_0 : i32, i32
  }
  func.func @transform_4(%arg0: i32) -> (i32, i32) {
    %c0_i32 = arith.constant 0 : i32
    %c0_i32_0 = arith.constant 0 : i32
    return %arg0, %c0_i32 : i32, i32
  }
}

module attributes {stable_mosaic.version = 11 : i64} {
  func.func @_input_layer_kernel(%arg0: i32, %arg1: memref<16x16xf32, #tpu.memory_space<vmem>>, %arg2: memref<16x128xbf16, #tpu.memory_space<vmem>>, %arg3: memref<1x128xf32, #tpu.memory_space<vmem>>, %arg4: memref<16x128xf32, #tpu.memory_space<vmem>>, %arg5: memref<16x128xf32, #tpu.memory_space<vmem>>) attributes {dimension_semantics = [#tpu.dimension_semantics<parallel>], iteration_bounds = array<i64: 1>, scalar_prefetch = 0 : i64, scratch_operands = 0 : i64, tpu.core_type = #tpu.core_type<tc>, window_params = [{transform_indices = @transform_0, window_bounds = array<i64: 16, 16>}, {pipeline_mode = #tpu.pipeline_mode<synchronous>, transform_indices = @transform_1, window_bounds = array<i64: 16, 128>}, {pipeline_mode = #tpu.pipeline_mode<synchronous>, transform_indices = @transform_2, window_bounds = array<i64: 1, 128>}, {pipeline_mode = #tpu.pipeline_mode<synchronous>, transform_indices = @transform_3, window_bounds = array<i64: 16, 128>}, {transform_indices = @transform_4, window_bounds = array<i64: 16, 128>}]} {
    %c0 = arith.constant 0 : index
    %c0_0 = arith.constant 0 : index
    %0 = vector.load %arg1[%c0, %c0_0] : memref<16x16xf32, #tpu.memory_space<vmem>>, vector<16x16xf32>
    %1 = arith.truncf %0 : vector<16x16xf32> to vector<16x16xbf16>
    %c0_1 = arith.constant 0 : index
    %c0_2 = arith.constant 0 : index
    %2 = vector.load %arg2[%c0_1, %c0_2] : memref<16x128xbf16, #tpu.memory_space<vmem>>, vector<16x128xbf16>
    %cst = arith.constant dense<0.000000e+00> : vector<16x128xf32>
    %3 = tpu.matmul %1, %2, %cst {dimension_numbers = #tpu.dot_dimension_numbers<[1], [0], [0], [1], [0, 0, 1, 1], [], []>} : vector<16x16xbf16>, vector<16x128xbf16>, vector<16x128xf32> -> vector<16x128xf32>
    %c0_3 = arith.constant 0 : index
    %c0_4 = arith.constant 0 : index
    %4 = vector.load %arg3[%c0_3, %c0_4] : memref<1x128xf32, #tpu.memory_space<vmem>>, vector<1x128xf32>
    %5 = vector.broadcast %4 : vector<1x128xf32> to vector<16x128xf32>
    %6 = arith.addf %3, %5 : vector<16x128xf32>
    %cst_5 = arith.constant 0.000000e+00 : f32
    %7 = vector.broadcast %cst_5 : f32 to vector<16x128xf32>
    %8 = arith.maximumf %6, %7 : vector<16x128xf32>
    %c0_6 = arith.constant 0 : index
    %c0_7 = arith.constant 0 : index
    %9 = vector.load %arg4[%c0_6, %c0_7] : memref<16x128xf32, #tpu.memory_space<vmem>>, vector<16x128xf32>
    %10 = arith.addf %8, %9 : vector<16x128xf32>
    %c0_8 = arith.constant 0 : index
    %c0_9 = arith.constant 0 : index
    %11 = vector.load %arg5[%c0_8, %c0_9] : memref<16x128xf32, #tpu.memory_space<vmem>>, vector<16x128xf32>
    tpu.vector_store %arg5[%c0_8, %c0_9], %10 {strides = array<i32>} : memref<16x128xf32, #tpu.memory_space<vmem>>, vector<16x128xf32>,
    return
  }
  func.func @transform_0(%arg0: i32) -> (i32, i32) {
    %c0_i32 = arith.constant 0 : i32
    %c0_i32_0 = arith.constant 0 : i32
    return %arg0, %c0_i32 : i32, i32
  }
  func.func @transform_1(%arg0: i32) -> (i32, i32) {
    %c0_i32 = arith.constant 0 : i32
    %c0_i32_0 = arith.constant 0 : i32
    %c0_i32_1 = arith.constant 0 : i32
    return %c0_i32, %c0_i32_0 : i32, i32
  }
  func.func @transform_2(%arg0: i32) -> (i32, i32) {
    %c0_i32 = arith.constant 0 : i32
    %c0_i32_0 = arith.constant 0 : i32
    %c0_i32_1 = arith.constant 0 : i32
    return %c0_i32, %c0_i32_0 : i32, i32
  }
  func.func @transform_3(%arg0: i32) -> (i32, i32) {
    %c0_i32 = arith.constant 0 : i32
    %c0_i32_0 = arith.constant 0 : i32
    %c0_i32_1 = arith.constant 0 : i32
    return %c0_i32, %c0_i32_0 : i32, i32
  }
  func.func @transform_4(%arg0: i32) -> (i32, i32) {
    %c0_i32 = arith.constant 0 : i32
    %c0_i32_0 = arith.constant 0 : i32
    return %arg0, %c0_i32 : i32, i32
  }
}

</mosaic_0001>

<llo_original>
// kernel: tpu_custom_call.1
$region0: #{tpu_custom_call.1}
  #allocation0 [shape = 'u32[]', space=smem, size = 0x4, offset = 0x4, fixed_abs, tag = 'smem constant byte address 0x4 - core index']
  #allocation1 [shape = 'u32[144,128]{1,0:T(1,128)}', space=vmem, size = 0x12000, scoped, tag = 'internal scratch']
  %s0 = inlined_call_operand.hbm [shape: f32[16,16], index: 0, kind: input, shape index: {}]
  %s1 = inlined_call_operand.hbm [shape: bf16[16,128], index: 1, kind: input, shape index: {}]
  %s2 = inlined_call_operand.vmem [shape: f32[1,128], index: 2, kind: input, shape index: {}]
  %s3 = inlined_call_operand.hbm [shape: f32[16,128], index: 3, kind: input, shape index: {}]
  %s4 = inlined_call_operand.hbm [shape: f32[16,128], index: 4, kind: output, shape index: {}]
  %s5 = sld [smem:[#allocation0]]
  $region38: #{tpu_custom_call.1} parent=0
    _
  %s7 = ssub.s32 1, %s5
  %s8 = scalar_select 0, %s7, %s5
  $region1: #{tpu_custom_call.1} parent=0
    #allocation2 [shape = 'u8[8192]{0}', space=vmem, size = 0x2000, scoped, tag = 'input window, operand 0, single buffered']
    #allocation3 [shape = 's32[1]{0}', space=sflag, size = 0x4, scoped, tag = 'scoped memory for tpu_custom_call.1']
    #allocation4 [shape = 's32[1]{0}', space=sflag, size = 0x4, scoped, tag = 'scoped memory for tpu_custom_call.1']
    #allocation5 [shape = 'u8[4096]{0}', space=vmem, size = 0x1000, scoped, tag = 'input window, operand 1, single buffered']
    #allocation6 [shape = 's32[1]{0}', space=sflag, size = 0x4, scoped, tag = 'scoped memory for tpu_custom_call.1']
    #allocation7 [shape = 'u8[8192]{0}', space=vmem, size = 0x2000, scoped, tag = 'input window, operand 3, single buffered']
    #allocation8 [shape = 'u8[8192]{0}', space=vmem, size = 0x2000, scoped, tag = 'output window, operand 0, single buffered']
    %9 = vsyncpa [#allocation3], 0
    %10 = vsyncpa [#allocation6], 0
    %11 = vsyncpa [#allocation4], 0
    // Predicated region
    $region2: #{tpu_custom_call.1} parent=1 // pred_check
      _
    $region3: #{tpu_custom_call.1} parent=1 // pred_check_branch
      %13 = sbr.rel (0) target = $region5
    $region4: #{tpu_custom_call.1} parent=1 // pred_region
      %s15 = ssub.s32 256, 256
      %16 = vsyncadd [#allocation3], %s15
      %s17 = sshll.u32 [#allocation2], 4
      %s18 = int_to_ptr.vmem [resolvable:$true] %s17
      %23 = dma.hbm_to_vmem [thread:$0]  %s0, 256, %s18, [#allocation3], 128, 128, 8
    $region5: #{tpu_custom_call.1} parent=1 // pred_fallthru
      _
    // Predicated region
    $region6: #{tpu_custom_call.1} parent=1 // pred_check
      _
    $region7: #{tpu_custom_call.1} parent=1 // pred_check_branch
      %25 = sbr.rel (0) target = $region9
    $region8: #{tpu_custom_call.1} parent=1 // pred_region
      %s27 = ssub.s32 128, 128
      %28 = vsyncadd [#allocation6], %s27
      %s29 = sshll.u32 [#allocation5], 4
      %s30 = int_to_ptr.vmem [resolvable:$true] %s29
      %35 = dma.hbm_to_vmem [thread:$0]  %s1, 128, %s30, [#allocation6], 64, 64, 4
    $region9: #{tpu_custom_call.1} parent=1 // pred_fallthru
      _
    // Predicated region
    $region10: #{tpu_custom_call.1} parent=1 // pred_check
      _
    $region11: #{tpu_custom_call.1} parent=1 // pred_check_branch
      %37 = sbr.rel (0) target = $region13
    $region12: #{tpu_custom_call.1} parent=1 // pred_region
      _
    $region13: #{tpu_custom_call.1} parent=1 // pred_fallthru
      _
    // Predicated region
    $region14: #{tpu_custom_call.1} parent=1 // pred_check
      _
    $region15: #{tpu_custom_call.1} parent=1 // pred_check_branch
      %39 = sbr.rel (0) target = $region17
    $region16: #{tpu_custom_call.1} parent=1 // pred_region
      %s41 = ssub.s32 256, 256
      %42 = vsyncadd [#allocation6], %s41
      %s43 = sshll.u32 [#allocation7], 4
      %s44 = int_to_ptr.vmem [resolvable:$true] %s43
      %49 = dma.hbm_to_vmem [thread:$0]  %s3, 256, %s44, [#allocation6], 128, 128, 8
    $region17: #{tpu_custom_call.1} parent=1 // pred_fallthru
      _
    // Predicated region
    $region18: #{tpu_custom_call.1} parent=1 // pred_check
      _
    $region19: #{tpu_custom_call.1} parent=1 // pred_check_branch
      %51 = sbr.rel (0) target = $region21
    $region20: #{tpu_custom_call.1} parent=1 // pred_region
      %52 = dma.done [#allocation3], 256
    $region21: #{tpu_custom_call.1} parent=1 // pred_fallthru
      _
    // Predicated region
    $region22: #{tpu_custom_call.1} parent=1 // pred_check
      _
    $region23: #{tpu_custom_call.1} parent=1 // pred_check_branch
      %54 = sbr.rel (0) target = $region25
    $region24: #{tpu_custom_call.1} parent=1 // pred_region
      %55 = dma.done [#allocation6], 128
    $region25: #{tpu_custom_call.1} parent=1 // pred_fallthru
      _
    // Predicated region
    $region26: #{tpu_custom_call.1} parent=1 // pred_check
      _
    $region27: #{tpu_custom_call.1} parent=1 // pred_check_branch
      %57 = sbr.rel (0) target = $region29
    $region28: #{tpu_custom_call.1} parent=1 // pred_region
      %58 = dma.done [#allocation6], 256
    $region29: #{tpu_custom_call.1} parent=1 // pred_fallthru
      _
    %v60 = vld [vmem:[#allocation2] sm:$0xff]
    %v61 = vld [vmem:[#allocation2 + $0x8] sm:$0xff]
    %v62 = vpack.c.bf16 %v61, %v60
    %v63 = vld [vmem:[#allocation5] sm:$0xf]
    %v64 = vld [vmem:[#allocation5 + $0x4] sm:$0xf]
    %v65 = vld [vmem:[%s2] sm:$0x1]
    %v67 = vlaneseq
    %v68 = vshrl.u32 %v67, 7
    %v69 = vsub.s32 0, %v68
    %v70 = vrot.slane %v65, %v69
    %v74 = vunpack.c.l.b16 %v63
    %v75 = vunpack.c.l.b16 %v64
    %v76 = vpack.c.b16 %v75, %v74
    %vm78 = vcmask 130048
    %v80 = vsel %vm78, %v62, 0
    %82 = vmatprep.subr.bf16.mxu0 0
    %83 = vmatpush1.bf16.msra.mxu0 %v76
    %84 = vmatprep.subr.bf16.mxu0 0
    %85 = vmatpush1.bf16.msra.mxu0 0
    %86 = vmatprep.subr.bf16.mxu0 0
    %87 = vmatpush1.bf16.msra.mxu0 0
    %88 = vmatprep.subr.bf16.mxu0 0
    %89 = vmatpush1.bf16.msra.mxu0 0
    %90 = vmatprep.subr.bf16.mxu0 0
    %91 = vmatpush1.bf16.msra.mxu0 0
    %92 = vmatprep.subr.bf16.mxu0 0
    %93 = vmatpush1.bf16.msra.mxu0 0
    %94 = vmatprep.subr.bf16.mxu0 0
    %95 = vmatpush1.bf16.msra.mxu0 0
    %96 = vmatprep.subr.bf16.mxu0 0
    %97 = vmatpush1.bf16.msra.mxu0 0
    %98 = vmatprep.subr.bf16.mxu0 0
    %99 = vmatpush1.bf16.msra.mxu0 0
    %100 = vmatprep.subr.bf16.mxu0 0
    %101 = vmatpush1.bf16.msra.mxu0 0
    %102 = vmatprep.subr.bf16.mxu0 0
    %103 = vmatpush1.bf16.msra.mxu0 0
    %104 = vmatprep.subr.bf16.mxu0 0
    %105 = vmatpush1.bf16.msra.mxu0 0
    %106 = vmatprep.subr.bf16.mxu0 0
    %107 = vmatpush1.bf16.msra.mxu0 0
    %108 = vmatprep.subr.bf16.mxu0 0
    %109 = vmatpush1.bf16.msra.mxu0 0
    %110 = vmatprep.subr.bf16.mxu0 0
    %111 = vmatpush1.bf16.msra.mxu0 0
    %112 = vmatprep.subr.bf16.mxu0 0
    %113 = vmatpush1.bf16.msra.mxu0 0
    %114 = vmatprep.mubr.bf16.mxu0 0
    %115 = vmatmul.mubr.bf16.gmra.mrb[0].mxu0 %v80
    %v116 = vpop.f32.mrb[0].mxu0
    %v117 = vadd.f32 %v70, %v116
    %v118 = vpop.f32.mrb[0].mxu0
    %v119 = vpop.f32.mrb[0].mxu0
    %v120 = vadd.f32 %v70, %v119
    %v121 = vpop.f32.mrb[0].mxu0
    %122 = vdwg.mxu0
    %v123 = vmax.f32 %v117, 0.0
    %v124 = vmax.f32 %v120, 0.0
    %v125 = vld [vmem:[#allocation7] sm:$0xff]
    %v126 = vld [vmem:[#allocation7 + $0x8] sm:$0xff]
    %v127 = vadd.f32 %v123, %v125
    %v128 = vadd.f32 %v124, %v126
    %129 = vst [vmem:[#allocation8] sm:$0xff] %v127
    %130 = vst [vmem:[#allocation8 + $0x8] sm:$0xff] %v128
    // Predicated region
    $region30: #{tpu_custom_call.1} parent=1 // pred_check
      _
    $region31: #{tpu_custom_call.1} parent=1 // pred_check_branch
      %132 = sbr.rel (0) target = $region33
    $region32: #{tpu_custom_call.1} parent=1 // pred_region
      %s134 = ssub.s32 256, 256
      %135 = vsyncadd [#allocation4], %s134
      %s136 = sshll.u32 [#allocation8], 4
      %s137 = int_to_ptr.vmem [resolvable:$true] %s136
      %142 = dma.vmem_to_hbm [thread:$0]  %s137, 256, %s4, [#allocation4], 128, 128, 8
    $region33: #{tpu_custom_call.1} parent=1 // pred_fallthru
      _
    // Predicated region
    $region34: #{tpu_custom_call.1} parent=1 // pred_check
      _
    $region35: #{tpu_custom_call.1} parent=1 // pred_check_branch
      %144 = sbr.rel (0) target = $region37
    $region36: #{tpu_custom_call.1} parent=1 // pred_region
      %145 = dma.done [#allocation4], 256
    $region37: #{tpu_custom_call.1} parent=1 // pred_fallthru
      _
    %146 = vsyncpa [#allocation3], 1
    %147 = vsyncpa [#allocation6], 1
    %148 = vsyncpa [#allocation4], 1

// kernel: tpu_custom_call.1
$region0: #{tpu_custom_call.1}
  #allocation0 [shape = 'u32[]', space=smem, size = 0x4, offset = 0x4, fixed_abs, tag = 'smem constant byte address 0x4 - core index']
  #allocation1 [shape = 'u32[144,128]{1,0:T(1,128)}', space=vmem, size = 0x12000, scoped, tag = 'internal scratch']
  %s0 = inlined_call_operand.hbm [shape: f32[16,16], index: 0, kind: input, shape index: {}]
  %s1 = inlined_call_operand.hbm [shape: bf16[16,128], index: 1, kind: input, shape index: {}]
  %s2 = inlined_call_operand.vmem [shape: f32[1,128], index: 2, kind: input, shape index: {}]
  %s3 = inlined_call_operand.hbm [shape: f32[16,128], index: 3, kind: input, shape index: {}]
  %s4 = inlined_call_operand.hbm [shape: f32[16,128], index: 4, kind: output, shape index: {}]
  %s5 = sld [smem:[#allocation0]]
  $region38: #{tpu_custom_call.1} parent=0
    _
  %s7 = ssub.s32 1, %s5
  %s8 = scalar_select 0, %s7, %s5
  $region1: #{tpu_custom_call.1} parent=0
    #allocation2 [shape = 'u8[8192]{0}', space=vmem, size = 0x2000, scoped, tag = 'input window, operand 0, single buffered']
    #allocation3 [shape = 's32[1]{0}', space=sflag, size = 0x4, scoped, tag = 'scoped memory for tpu_custom_call.1']
    #allocation4 [shape = 's32[1]{0}', space=sflag, size = 0x4, scoped, tag = 'scoped memory for tpu_custom_call.1']
    #allocation5 [shape = 'u8[4096]{0}', space=vmem, size = 0x1000, scoped, tag = 'input window, operand 1, single buffered']
    #allocation6 [shape = 's32[1]{0}', space=sflag, size = 0x4, scoped, tag = 'scoped memory for tpu_custom_call.1']
    #allocation7 [shape = 'u8[8192]{0}', space=vmem, size = 0x2000, scoped, tag = 'input window, operand 3, single buffered']
    #allocation8 [shape = 'u8[8192]{0}', space=vmem, size = 0x2000, scoped, tag = 'output window, operand 0, single buffered']
    %9 = vsyncpa [#allocation3], 0
    %10 = vsyncpa [#allocation6], 0
    %11 = vsyncpa [#allocation4], 0
    // Predicated region
    $region2: #{tpu_custom_call.1} parent=1 // pred_check
      _
    $region3: #{tpu_custom_call.1} parent=1 // pred_check_branch
      %13 = sbr.rel (0) target = $region5
    $region4: #{tpu_custom_call.1} parent=1 // pred_region
      %s15 = ssub.s32 256, 256
      %16 = vsyncadd [#allocation3], %s15
      %s17 = sshll.u32 [#allocation2], 4
      %s18 = int_to_ptr.vmem [resolvable:$true] %s17
      %23 = dma.hbm_to_vmem [thread:$0]  %s0, 256, %s18, [#allocation3], 128, 128, 8
    $region5: #{tpu_custom_call.1} parent=1 // pred_fallthru
      _
    // Predicated region
    $region6: #{tpu_custom_call.1} parent=1 // pred_check
      _
    $region7: #{tpu_custom_call.1} parent=1 // pred_check_branch
      %25 = sbr.rel (0) target = $region9
    $region8: #{tpu_custom_call.1} parent=1 // pred_region
      %s27 = ssub.s32 128, 128
      %28 = vsyncadd [#allocation6], %s27
      %s29 = sshll.u32 [#allocation5], 4
      %s30 = int_to_ptr.vmem [resolvable:$true] %s29
      %35 = dma.hbm_to_vmem [thread:$0]  %s1, 128, %s30, [#allocation6], 64, 64, 4
    $region9: #{tpu_custom_call.1} parent=1 // pred_fallthru
      _
    // Predicated region
    $region10: #{tpu_custom_call.1} parent=1 // pred_check
      _
    $region11: #{tpu_custom_call.1} parent=1 // pred_check_branch
      %37 = sbr.rel (0) target = $region13
    $region12: #{tpu_custom_call.1} parent=1 // pred_region
      _
    $region13: #{tpu_custom_call.1} parent=1 // pred_fallthru
      _
    // Predicated region
    $region14: #{tpu_custom_call.1} parent=1 // pred_check
      _
    $region15: #{tpu_custom_call.1} parent=1 // pred_check_branch
      %39 = sbr.rel (0) target = $region17
    $region16: #{tpu_custom_call.1} parent=1 // pred_region
      %s41 = ssub.s32 256, 256
      %42 = vsyncadd [#allocation6], %s41
      %s43 = sshll.u32 [#allocation7], 4
      %s44 = int_to_ptr.vmem [resolvable:$true] %s43
      %49 = dma.hbm_to_vmem [thread:$0]  %s3, 256, %s44, [#allocation6], 128, 128, 8
    $region17: #{tpu_custom_call.1} parent=1 // pred_fallthru
      _
    // Predicated region
    $region18: #{tpu_custom_call.1} parent=1 // pred_check
      _
    $region19: #{tpu_custom_call.1} parent=1 // pred_check_branch
      %51 = sbr.rel (0) target = $region21
    $region20: #{tpu_custom_call.1} parent=1 // pred_region
      %52 = dma.done [#allocation3], 256
    $region21: #{tpu_custom_call.1} parent=1 // pred_fallthru
      _
    // Predicated region
    $region22: #{tpu_custom_call.1} parent=1 // pred_check
      _
    $region23: #{tpu_custom_call.1} parent=1 // pred_check_branch
      %54 = sbr.rel (0) target = $region25
    $region24: #{tpu_custom_call.1} parent=1 // pred_region
      %55 = dma.done [#allocation6], 128
    $region25: #{tpu_custom_call.1} parent=1 // pred_fallthru
      _
    // Predicated region
    $region26: #{tpu_custom_call.1} parent=1 // pred_check
      _
    $region27: #{tpu_custom_call.1} parent=1 // pred_check_branch
      %57 = sbr.rel (0) target = $region29
    $region28: #{tpu_custom_call.1} parent=1 // pred_region
      %58 = dma.done [#allocation6], 256
    $region29: #{tpu_custom_call.1} parent=1 // pred_fallthru
      _
    %v60 = vld [vmem:[#allocation2] sm:$0xff]
    %v61 = vld [vmem:[#allocation2 + $0x8] sm:$0xff]
    %v62 = vpack.c.bf16 %v61, %v60
    %v63 = vld [vmem:[#allocation5] sm:$0xf]
    %v64 = vld [vmem:[#allocation5 + $0x4] sm:$0xf]
    %v65 = vld [vmem:[%s2] sm:$0x1]
    %v67 = vlaneseq
    %v68 = vshrl.u32 %v67, 7
    %v69 = vsub.s32 0, %v68
    %v70 = vrot.slane %v65, %v69
    %v74 = vunpack.c.l.b16 %v63
    %v75 = vunpack.c.l.b16 %v64
    %v76 = vpack.c.b16 %v75, %v74
    %vm78 = vcmask 130048
    %v80 = vsel %vm78, %v62, 0
    %82 = vmatprep.subr.bf16.mxu0 0
    %83 = vmatpush1.bf16.msra.mxu0 %v76
    %84 = vmatprep.subr.bf16.mxu0 0
    %85 = vmatpush1.bf16.msra.mxu0 0
    %86 = vmatprep.subr.bf16.mxu0 0
    %87 = vmatpush1.bf16.msra.mxu0 0
    %88 = vmatprep.subr.bf16.mxu0 0
    %89 = vmatpush1.bf16.msra.mxu0 0
    %90 = vmatprep.subr.bf16.mxu0 0
    %91 = vmatpush1.bf16.msra.mxu0 0
    %92 = vmatprep.subr.bf16.mxu0 0
    %93 = vmatpush1.bf16.msra.mxu0 0
    %94 = vmatprep.subr.bf16.mxu0 0
    %95 = vmatpush1.bf16.msra.mxu0 0
    %96 = vmatprep.subr.bf16.mxu0 0
    %97 = vmatpush1.bf16.msra.mxu0 0
    %98 = vmatprep.subr.bf16.mxu0 0
    %99 = vmatpush1.bf16.msra.mxu0 0
    %100 = vmatprep.subr.bf16.mxu0 0
    %101 = vmatpush1.bf16.msra.mxu0 0
    %102 = vmatprep.subr.bf16.mxu0 0
    %103 = vmatpush1.bf16.msra.mxu0 0
    %104 = vmatprep.subr.bf16.mxu0 0
    %105 = vmatpush1.bf16.msra.mxu0 0
    %106 = vmatprep.subr.bf16.mxu0 0
    %107 = vmatpush1.bf16.msra.mxu0 0
    %108 = vmatprep.subr.bf16.mxu0 0
    %109 = vmatpush1.bf16.msra.mxu0 0
    %110 = vmatprep.subr.bf16.mxu0 0
    %111 = vmatpush1.bf16.msra.mxu0 0
    %112 = vmatprep.subr.bf16.mxu0 0
    %113 = vmatpush1.bf16.msra.mxu0 0
    %114 = vmatprep.mubr.bf16.mxu0 0
    %115 = vmatmul.mubr.bf16.gmra.mrb[0].mxu0 %v80
    %v116 = vpop.f32.mrb[0].mxu0
    %v117 = vadd.f32 %v70, %v116
    %v118 = vpop.f32.mrb[0].mxu0
    %v119 = vpop.f32.mrb[0].mxu0
    %v120 = vadd.f32 %v70, %v119
    %v121 = vpop.f32.mrb[0].mxu0
    %122 = vdwg.mxu0
    %v123 = vmax.f32 %v117, 0.0
    %v124 = vmax.f32 %v120, 0.0
    %v125 = vld [vmem:[#allocation7] sm:$0xff]
    %v126 = vld [vmem:[#allocation7 + $0x8] sm:$0xff]
    %v127 = vadd.f32 %v123, %v125
    %v128 = vadd.f32 %v124, %v126
    %129 = vst [vmem:[#allocation8] sm:$0xff] %v127
    %130 = vst [vmem:[#allocation8 + $0x8] sm:$0xff] %v128
    // Predicated region
    $region30: #{tpu_custom_call.1} parent=1 // pred_check
      _
    $region31: #{tpu_custom_call.1} parent=1 // pred_check_branch
      %132 = sbr.rel (0) target = $region33
    $region32: #{tpu_custom_call.1} parent=1 // pred_region
      %s134 = ssub.s32 256, 256
      %135 = vsyncadd [#allocation4], %s134
      %s136 = sshll.u32 [#allocation8], 4
      %s137 = int_to_ptr.vmem [resolvable:$true] %s136
      %142 = dma.vmem_to_hbm [thread:$0]  %s137, 256, %s4, [#allocation4], 128, 128, 8
    $region33: #{tpu_custom_call.1} parent=1 // pred_fallthru
      _
    // Predicated region
    $region34: #{tpu_custom_call.1} parent=1 // pred_check
      _
    $region35: #{tpu_custom_call.1} parent=1 // pred_check_branch
      %144 = sbr.rel (0) target = $region37
    $region36: #{tpu_custom_call.1} parent=1 // pred_region
      %145 = dma.done [#allocation4], 256
    $region37: #{tpu_custom_call.1} parent=1 // pred_fallthru
      _
    %146 = vsyncpa [#allocation3], 1
    %147 = vsyncpa [#allocation6], 1
    %148 = vsyncpa [#allocation4], 1

</llo_original>
